<compile_context>
chip_gen: v5e
topology: v5e:2x2
jax: 0.10.0
libtpu: 0.0.40
codegen_flags: <defaults>
</compile_context>

<pallas_src>
import math

import jax
import jax.numpy as jnp
from jax.experimental import pallas as pl
from jax.experimental.pallas import tpu as pltpu


def _add_pe_kernel(x_ref, pe_ref, o_ref):
    # x_ref: (TB, TC), pe_ref: (1, TC) -> broadcast add over the row tile.
    # Kernel is purely HBM-bandwidth bound; keep the body a single VPU add.
    o_ref[...] = x_ref[...] + pe_ref[...]


def make_pe_table(d_model, max_len=5000, dtype=jnp.float32):
    """Reproduces the PyTorch buffer: pe = sin(pos*div) + cos(pos*div)."""
    position = jnp.arange(max_len, dtype=jnp.float32)[:, None]          # (max_len, 1)
    div_term = jnp.exp(
        jnp.arange(d_model, dtype=jnp.float32) * (-(math.log(10000.0) / d_model))
    )                                                                   # (d_model,)
    ang = position * div_term                                           # (max_len, d_model)
    return (jnp.sin(ang) + jnp.cos(ang)).astype(dtype)


def _round_up(v, m):
    return ((v + m - 1) // m) * m


def positional_embedding(x, pe_table, *, tb_max=512, tc_max=2048, donate_x=True):
    """x: (B, L, d_model); pe_table: (max_len, d_model). Returns x + pe[:L]."""
    B, L, D = x.shape
    cols = L * D
    itemsize = jnp.dtype(x.dtype).itemsize

    # Flatten (L, D) into one lane-dense trailing axis (d_model alone is often
    # < 128 and would force masked vst.msk partial stores).
    x2d = x.reshape(B, cols)
    # NOTE: matches x.dtype. PyTorch promotes bf16 x to fp32 via the fp32 pe
    # buffer; if bit-parity for low-precision inputs matters, add in fp32.
    pe2d = jax.lax.slice(pe_table, (0, 0), (L, D)).reshape(1, cols).astype(x.dtype)

    # --- tile selection -----------------------------------------------------
    # Lane axis: multiple of 128, capped at tc_max (no full-extent fallback,
    # so the block size is always bounded regardless of L*D).
    tc = min(tc_max, _round_up(cols, 128))
    # Sublane axis: full extent if it fits one block, else a multiple of the
    # dtype packing factor.
    sub = {4: 8, 2: 16, 1: 32}.get(itemsize, 8)
    tb = B if B <= tb_max else (tb_max // sub) * sub

    # Non-dividing tails are handled by Pallas's masked tail blocks.
    grid_cols = pl.cdiv(cols, tc)
    grid_rows = pl.cdiv(B, tb)
    # Column axis OUTER (slow) so pe's block index is constant over the inner
    # row loop and its per-step DMA is skipped.
    grid = (grid_cols, grid_rows)

    kwargs = {}
    if donate_x:
        # x and out have identical shape/dtype -> donate x's HBM buffer.
        kwargs["input_output_aliases"] = {0: 0}

    out2d = pl.pallas_call(
        _add_pe_kernel,
        out_shape=jax.ShapeDtypeStruct((B, cols), x.dtype),
        grid_spec=pltpu.PrefetchScalarGridSpec(
            num_scalar_prefetch=0,
            grid=grid,
            in_specs=[
                pl.BlockSpec((tb, tc), lambda j, i: (i, j)),   # x tile
                pl.BlockSpec((1, tc), lambda j, i: (0, j)),    # pe slab (reused over rows)
            ],
            out_specs=pl.BlockSpec((tb, tc), lambda j, i: (i, j)),
        ),
        compiler_params=pltpu.CompilerParams(
            dimension_semantics=("parallel", "parallel"),
            vmem_limit_bytes=48 << 20,   # 2 bufs x (x + out) x ~4 MiB + pe slabs
        ),
        cost_estimate=pl.CostEstimate(
            flops=B * cols,
            transcendentals=0,
            bytes_accessed=2 * B * cols * itemsize + cols * itemsize,
        ),
        **kwargs,
    )(x2d, pe2d)

    return out2d.reshape(B, L, D)


if __name__ == "__main__":
    max_len = 5000
    key = jax.random.PRNGKey(0)
    k1, k2 = jax.random.split(key)

    # Primary (small) check: batch=2, seq=8, hidden=32.
    B, L, D = 2, 8, 32
    x = jax.random.normal(k1, (B, L, D), jnp.float32)
    pe = make_pe_table(D, max_len)
    ref = x + pe[None, :L, :]                       # computed before donation

    out = jax.block_until_ready(positional_embedding(x, pe))
    assert out.shape == (B, L, D)
    assert jnp.allclose(out, ref, atol=1e-6, rtol=1e-6)

    # Second check: multi-block grid with non-dividing row AND column tails
    # (exercises Pallas's masked tail-block path; no padding in the wrapper).
    B2, L2, D2 = 20, 48, 96                          # cols = 4608 -> 3 col blocks
    x2 = jax.random.normal(k2, (B2, L2, D2), jnp.float32)
    pe2 = make_pe_table(D2, max_len)
    ref2 = x2 + pe2[None, :L2, :]

    out2 = jax.block_until_ready(
        positional_embedding(x2, pe2, tb_max=8, tc_max=2048)  # 3x3 grid, row tail of 4
    )
    assert jnp.allclose(out2, ref2, atol=1e-6, rtol=1e-6)

    print("KERNEL_OK")
</pallas_src>

<mosaic_0001>
module attributes {stable_mosaic.version = 11 : i64} {
  func.func @_add_pe_kernel(%arg0: i32, %arg1: i32, %arg2: memref<2x256xf32, #tpu.memory_space<vmem>>, %arg3: memref<1x256xf32, #tpu.memory_space<vmem>>, %arg4: memref<2x256xf32, #tpu.memory_space<vmem>>) attributes {dimension_semantics = [#tpu.dimension_semantics<parallel>, #tpu.dimension_semantics<parallel>], iteration_bounds = array<i64: 1, 1>, scalar_prefetch = 0 : i64, scratch_operands = 0 : i64, tpu.core_type = #tpu.core_type<tc>, window_params = [{transform_indices = @transform_0, window_bounds = array<i64: 2, 256>}, {transform_indices = @transform_1, window_bounds = array<i64: 1, 256>}, {transform_indices = @transform_2, window_bounds = array<i64: 2, 256>}]} {
    %c0 = arith.constant 0 : index
    %c0_0 = arith.constant 0 : index
    %0 = vector.load %arg2[%c0, %c0_0] : memref<2x256xf32, #tpu.memory_space<vmem>>, vector<2x256xf32>
    %c0_1 = arith.constant 0 : index
    %c0_2 = arith.constant 0 : index
    %1 = vector.load %arg3[%c0_1, %c0_2] : memref<1x256xf32, #tpu.memory_space<vmem>>, vector<1x256xf32>
    %2 = vector.broadcast %1 : vector<1x256xf32> to vector<2x256xf32>
    %3 = arith.addf %0, %2 : vector<2x256xf32>
    %c0_3 = arith.constant 0 : index
    %c0_4 = arith.constant 0 : index
    %4 = vector.load %arg4[%c0_3, %c0_4] : memref<2x256xf32, #tpu.memory_space<vmem>>, vector<2x256xf32>
    tpu.vector_store %arg4[%c0_3, %c0_4], %3 {strides = array<i32>} : memref<2x256xf32, #tpu.memory_space<vmem>>, vector<2x256xf32>,
    return
  }
  func.func @transform_0(%arg0: i32, %arg1: i32) -> (i32, i32) {
    %c0_i32 = arith.constant 0 : i32
    return %arg1, %arg0 : i32, i32
  }
  func.func @transform_1(%arg0: i32, %arg1: i32) -> (i32, i32) {
    %c0_i32 = arith.constant 0 : i32
    %c0_i32_0 = arith.constant 0 : i32
    return %c0_i32, %arg0 : i32, i32
  }
  func.func @transform_2(%arg0: i32, %arg1: i32) -> (i32, i32) {
    %c0_i32 = arith.constant 0 : i32
    return %arg1, %arg0 : i32, i32
  }
}

</mosaic_0001>

<llo_original>
// kernel: tpu_custom_call.1
$region0: #{tpu_custom_call.1}
  #allocation0 [shape = 'u32[]', space=smem, size = 0x4, offset = 0x4, fixed_abs, tag = 'smem constant byte address 0x4 - core index']
  #allocation1 [shape = 'u32[72,128]{1,0:T(1,128)}', space=vmem, size = 0x9000, scoped, tag = 'internal scratch']
  %s0 = inlined_call_operand.hbm [shape: f32[2,256], index: 0, kind: input, shape index: {}, may-alias: {0,2}]
  %s1 = inlined_call_operand.vmem [shape: f32[1,256], index: 1, kind: input, shape index: {}]
  %s2 = inlined_call_operand.hbm [shape: f32[2,256], index: 2, kind: output, shape index: {}, may-alias: {0,2}]
  %s3 = sld [smem:[#allocation0]]
  $region22: #{tpu_custom_call.1} parent=0
    _
  %s5 = ssub.s32 1, %s3
  %s6 = scalar_select 0, %s5, %s3
  $region1: #{tpu_custom_call.1} parent=0
    #allocation2 [shape = 'u8[2048]{0}', space=vmem, size = 0x800, scoped, tag = 'input window, operand 0, single buffered']
    #allocation3 [shape = 's32[1]{0}', space=sflag, size = 0x4, scoped, tag = 'scoped memory for tpu_custom_call.1']
    #allocation4 [shape = 's32[1]{0}', space=sflag, size = 0x4, scoped, tag = 'scoped memory for tpu_custom_call.1']
    #allocation5 [shape = 'u8[2048]{0}', space=vmem, size = 0x800, scoped, tag = 'output window, operand 0, single buffered']
    %7 = vsyncpa [#allocation3], 0
    %8 = vsyncpa [#allocation4], 0
    // Predicated region
    $region2: #{tpu_custom_call.1} parent=1 // pred_check
      _
    $region3: #{tpu_custom_call.1} parent=1 // pred_check_branch
      %10 = sbr.rel (0) target = $region5
    $region4: #{tpu_custom_call.1} parent=1 // pred_region
      %12 = vsyncadd [#allocation3], 0
      %s14 = sshll.u32 %s0, 4
      %s15 = int_to_ptr.hbm [resolvable:$true] %s14
      %s16 = sshll.u32 [#allocation2], 4
      %s17 = int_to_ptr.vmem [resolvable:$true] %s16
      %19 = dma.hbm_to_vmem [thread:$0]  %s15, 64, %s17, [#allocation3]
    $region5: #{tpu_custom_call.1} parent=1 // pred_fallthru
      _
    // Predicated region
    $region6: #{tpu_custom_call.1} parent=1 // pred_check
      _
    $region7: #{tpu_custom_call.1} parent=1 // pred_check_branch
      %21 = sbr.rel (0) target = $region9
    $region8: #{tpu_custom_call.1} parent=1 // pred_region
      _
    $region9: #{tpu_custom_call.1} parent=1 // pred_fallthru
      _
    // Predicated region
    $region10: #{tpu_custom_call.1} parent=1 // pred_check
      _
    $region11: #{tpu_custom_call.1} parent=1 // pred_check_branch
      %23 = sbr.rel (0) target = $region13
    $region12: #{tpu_custom_call.1} parent=1 // pred_region
      %25 = dma.done [#allocation3], 64
    $region13: #{tpu_custom_call.1} parent=1 // pred_fallthru
      _
    %v26 = vld [vmem:[#allocation2] sm:$0xf]
    %v27 = vld [vmem:[%s1] sm:$0x3]
    %v29 = vperm.slane %v27, 0
    %v30 = vperm.slane %v27, 1
    %v31 = vrot.slane %v30, 6
    %vm32 = vcmask 1041408
    %v33 = vsel %vm32, %v29, %v31
    %v35 = vadd.f32 %v26, %v33
    %36 = vst [vmem:[#allocation5] sm:$0xf] %v35
    // Predicated region
    $region14: #{tpu_custom_call.1} parent=1 // pred_check
      _
    $region15: #{tpu_custom_call.1} parent=1 // pred_check_branch
      %38 = sbr.rel (0) target = $region17
    $region16: #{tpu_custom_call.1} parent=1 // pred_region
      %40 = vsyncadd [#allocation4], 0
      %s42 = sshll.u32 [#allocation5], 4
      %s43 = int_to_ptr.vmem [resolvable:$true] %s42
      %s44 = sshll.u32 %s2, 4
      %s45 = int_to_ptr.hbm [resolvable:$true] %s44
      %47 = dma.vmem_to_hbm [thread:$0]  %s43, 64, %s45, [#allocation4]
    $region17: #{tpu_custom_call.1} parent=1 // pred_fallthru
      _
    // Predicated region
    $region18: #{tpu_custom_call.1} parent=1 // pred_check
      _
    $region19: #{tpu_custom_call.1} parent=1 // pred_check_branch
      %49 = sbr.rel (0) target = $region21
    $region20: #{tpu_custom_call.1} parent=1 // pred_region
      %51 = dma.done [#allocation4], 64
    $region21: #{tpu_custom_call.1} parent=1 // pred_fallthru
      _
    %52 = vsyncpa [#allocation3], 1
    %53 = vsyncpa [#allocation4], 1

</llo_original>
